<compile_context>
chip_gen: v7x
topology: tpu7x:2x2x1
jax: 0.10.0
libtpu: 0.0.40
codegen_flags: <defaults>
</compile_context>

<pallas_src>
import math
import functools

import jax
import jax.numpy as jnp
from jax import lax
from jax.experimental import pallas as pl
from jax.experimental.pallas import tpu as pltpu


# --------------------------------------------------------------------------
# elementwise helpers (traced inside kernels)
# --------------------------------------------------------------------------
_GELU_C = math.sqrt(2.0 / math.pi)


def _gelu(x):
    # OpenAI tanh-approximate gelu; x*x*x instead of jnp.power (VALU-cheap).
    return 0.5 * x * (1.0 + jnp.tanh(_GELU_C * (x + 0.044715 * (x * x * x))))


def _layernorm(x, g, b, eps=1e-5):
    # OpenAI-style layernorm: epsilon inside the sqrt, biased variance.
    u = jnp.mean(x, axis=-1, keepdims=True)
    s = jnp.mean(jnp.square(x - u), axis=-1, keepdims=True)
    return g * ((x - u) * lax.rsqrt(s + eps)) + b


# --------------------------------------------------------------------------
# per-generation VMEM budgeting
# --------------------------------------------------------------------------
@functools.lru_cache(maxsize=None)
def _vmem_limit_bytes():
    # ~48 MiB on v7x (64 MiB physical), ~100 MiB on v5e/v6e (128 MiB physical),
    # always leaving headroom for Mosaic internal scratch.
    try:
        phys = int(pltpu.get_tpu_info().vmem_capacity_bytes)
    except Exception:
        return 64 * 1024 * 1024
    return int(max(32 * 1024 * 1024,
                   min(phys - 16 * 1024 * 1024, 100 * 1024 * 1024)))


def _compiler_params(dims):
    return pltpu.CompilerParams(dimension_semantics=dims,
                                vmem_limit_bytes=_vmem_limit_bytes())


# --------------------------------------------------------------------------
# Kernel 1: c_attn projection  (x @ w_attn + b_attn), tiled over (B, T)
# --------------------------------------------------------------------------
def _qkv_proj_kernel(x_ref, w_ref, b_ref, o_ref):
    cdt = w_ref.dtype                                   # matmul compute dtype
    qkv = jnp.dot(x_ref[...].astype(cdt), w_ref[...],
                  preferred_element_type=jnp.float32)
    qkv = qkv + b_ref[...].astype(jnp.float32)
    o_ref[...] = qkv.astype(o_ref.dtype)


def qkv_projection(x, w_attn, b_attn, *, q_block):
    B, T, nx = x.shape
    nf = w_attn.shape[1]
    nq = T // q_block
    return pl.pallas_call(
        _qkv_proj_kernel,
        out_shape=jax.ShapeDtypeStruct((B, T, nf), x.dtype),
        grid=(B, nq),
        in_specs=[
            pl.BlockSpec((pl.Squeezed(), q_block, nx), lambda b, qi: (b, qi, 0)),
            pl.BlockSpec(w_attn.shape, lambda b, qi: (0, 0)),
            pl.BlockSpec(b_attn.shape, lambda b, qi: (0, 0)),
        ],
        out_specs=pl.BlockSpec((pl.Squeezed(), q_block, nf),
                               lambda b, qi: (b, qi, 0)),
        compiler_params=_compiler_params(("parallel", "parallel")),
    )(x, w_attn, b_attn)


# --------------------------------------------------------------------------
# Kernel 2: flash attention (online softmax over KV tiles, causal skip) +
#           head-merge/c_proj + LN1 + MLP + LN2, fused per query tile.
# grid = (B, nq, nkv); the KV axis is last ("arbitrary", reduction).
# --------------------------------------------------------------------------
def _block_core_kernel(x_ref, q_ref, k_ref, v_ref,
                       w_ap_ref, b_ap_ref, g1_ref, bln1_ref,
                       w_fc_ref, b_fc_ref, w_pr_ref, b_pr_ref,
                       g2_ref, bln2_ref, o_ref,
                       m_scr, l_scr, acc_scr,
                       *, sm_scale, q_block, kv_block):
    kv = pl.program_id(2)
    n_kv = pl.num_programs(2)
    q0 = pl.program_id(1) * q_block                     # global first query row
    k0 = kv * kv_block                                  # global first key col
    cdt = w_fc_ref.dtype                                # matmul compute dtype

    # ---- init online-softmax state at the first KV tile --------------------
    @pl.when(kv == 0)
    def _init():
        m_scr[...] = jnp.full(m_scr.shape, -jnp.inf, jnp.float32)
        l_scr[...] = jnp.zeros(l_scr.shape, jnp.float32)
        acc_scr[...] = jnp.zeros(acc_scr.shape, jnp.float32)

    # ---- causal block skip: only KV tiles intersecting the lower triangle --
    @pl.when(k0 <= q0 + q_block - 1)
    def _update():
        q = q_ref[...].astype(cdt)                      # (H, tq,  hd)
        k = k_ref[...].astype(cdt)                      # (H, tkv, hd)
        v = v_ref[...].astype(cdt)                      # (H, tkv, hd)

        s = jnp.einsum('hqd,hkd->hqk', q, k,
                       preferred_element_type=jnp.float32)   # (H, tq, tkv)
        if sm_scale != 1.0:
            s = s * sm_scale

        rows = lax.broadcasted_iota(jnp.int32, (q_block, kv_block), 0) + q0
        cols = lax.broadcasted_iota(jnp.int32, (q_block, kv_block), 1) + k0
        s = jnp.where((rows >= cols)[None, :, :], s, -1e9)

        m_prev = m_scr[...]                                   # (H, tq, 1)
        m_new = jnp.maximum(m_prev, jnp.max(s, axis=-1, keepdims=True))
        alpha = jnp.exp(m_prev - m_new)
        p = jnp.exp(s - m_new)                                # (H, tq, tkv)
        l_scr[...] = alpha * l_scr[...] + jnp.sum(p, axis=-1, keepdims=True)
        acc_scr[...] = alpha * acc_scr[...] + jnp.einsum(
            'hqk,hkd->hqd', p.astype(cdt), v,
            preferred_element_type=jnp.float32)               # (H, tq, hd)
        m_scr[...] = m_new

    # ---- finalize on the last KV tile: merge + c_proj + LN1 + MLP + LN2 ----
    @pl.when(kv == n_kv - 1)
    def _finalize():
        ctx = acc_scr[...] * pl.reciprocal(l_scr[...], approx=True)

        # head-merge + c_proj: sum_h ctx[h] @ W[h] == concat(heads) @ W_proj
        a = jnp.einsum('hqd,hdn->hqn', ctx.astype(cdt), w_ap_ref[...],
                       preferred_element_type=jnp.float32)    # (H, tq, nx)
        a = jnp.sum(a, axis=0) + b_ap_ref[...].astype(jnp.float32)

        # residual + LayerNorm 1 (f32)
        x = x_ref[...].astype(jnp.float32)                    # (tq, nx)
        n = _layernorm(x + a,
                       g1_ref[...].astype(jnp.float32),
                       bln1_ref[...].astype(jnp.float32))

        # MLP
        h1 = jnp.dot(n.astype(cdt), w_fc_ref[...],
                     preferred_element_type=jnp.float32)
        h1 = _gelu(h1 + b_fc_ref[...].astype(jnp.float32))    # (tq, 4nx)
        mo = jnp.dot(h1.astype(cdt), w_pr_ref[...],
                     preferred_element_type=jnp.float32)
        mo = mo + b_pr_ref[...].astype(jnp.float32)           # (tq, nx)

        # residual + LayerNorm 2
        out = _layernorm(n + mo,
                         g2_ref[...].astype(jnp.float32),
                         bln2_ref[...].astype(jnp.float32))
        o_ref[...] = out.astype(o_ref.dtype)


# --------------------------------------------------------------------------
# Wrappers
# --------------------------------------------------------------------------
def transformer_block(x, params, n_head, *, scale=True,
                      q_block=256, kv_block=512):
    """One Block (Attention + LN + MLP + LN) as two pallas_calls."""
    B, T, nx = x.shape
    (w_attn, b_attn, w_aproj, b_aproj, g1, bln1,
     w_fc, b_fc, w_proj, b_proj, g2, bln2) = params
    assert nx % n_head == 0
    hd = nx // n_head

    q_block = min(q_block, T)
    kv_block = min(kv_block, T)
    assert T % q_block == 0, "sequence length must be divisible by the query tile"
    assert T % kv_block == 0, "sequence length must be divisible by the kv tile"
    nq = T // q_block
    nkv = T // kv_block

    # kernel 1: c_attn projection
    qkv = qkv_projection(x, w_attn, b_attn, q_block=q_block)   # (B, T, 3nx)

    # TODO(synk): head split kept as an XLA reshape/transpose (one qkv HBM
    # round trip); an in-kernel (tq,3nx)->(H,tq,hd) relayout or hd(<128)-wide
    # BlockSpec slicing is not reliably lowerable by Mosaic.
    def split_heads(t):                                        # -> (B, H, T, hd)
        return t.reshape(B, T, n_head, hd).transpose(0, 2, 1, 3)

    q = split_heads(qkv[..., :nx])
    k = split_heads(qkv[..., nx:2 * nx])
    v = split_heads(qkv[..., 2 * nx:])

    # per-head slices of the c_proj weight: row order of this reshape matches
    # the concat(heads) order, so sum_h ctx[h] @ W[h] == concat(heads) @ W.
    w_aproj_h = w_aproj.reshape(n_head, hd, nx)

    kernel = functools.partial(
        _block_core_kernel,
        sm_scale=(1.0 / math.sqrt(hd)) if scale else 1.0,
        q_block=q_block, kv_block=kv_block)

    seq_spec = pl.BlockSpec((pl.Squeezed(), q_block, nx),
                            lambda b, qi, kv: (b, qi, 0))
    q_spec = pl.BlockSpec((pl.Squeezed(), n_head, q_block, hd),
                          lambda b, qi, kv: (b, 0, qi, 0))
    kv_spec = pl.BlockSpec((pl.Squeezed(), n_head, kv_block, hd),
                           lambda b, qi, kv: (b, 0, kv, 0))

    def full_spec(arr):
        zeros = (0,) * arr.ndim
        return pl.BlockSpec(arr.shape, lambda b, qi, kv: zeros)

    return pl.pallas_call(
        kernel,
        out_shape=jax.ShapeDtypeStruct((B, T, nx), x.dtype),
        grid=(B, nq, nkv),
        in_specs=[
            seq_spec,                     # x (residual rows for this tile)
            q_spec, kv_spec, kv_spec,     # q tile, k tile, v tile
            full_spec(w_aproj_h), full_spec(b_aproj),
            full_spec(g1), full_spec(bln1),
            full_spec(w_fc), full_spec(b_fc),
            full_spec(w_proj), full_spec(b_proj),
            full_spec(g2), full_spec(bln2),
        ],
        out_specs=seq_spec,
        scratch_shapes=[
            pltpu.VMEM((n_head, q_block, 1), jnp.float32),   # running max
            pltpu.VMEM((n_head, q_block, 1), jnp.float32),   # running sum
            pltpu.VMEM((n_head, q_block, hd), jnp.float32),  # ctx accumulator
        ],
        compiler_params=_compiler_params(("parallel", "parallel", "arbitrary")),
    )(x, q, k, v, w_aproj_h, b_aproj, g1, bln1,
      w_fc, b_fc, w_proj, b_proj, g2, bln2)


def transformer_model(tokens, embed_w, block_params, n_head, *,
                      q_block=256, kv_block=512):
    """TransformerModel.forward: embedding-sum, then the stack of Blocks."""
    # TODO(synk): the nn.Embedding gather is a data-dependent gather with no
    # clean simple-Pallas equivalent here; it is left to XLA (jnp.take).
    e = jnp.take(embed_w, tokens, axis=0)          # (B, T, K, nx)
    h = e.sum(axis=2)                              # (B, T, nx); dropout = identity
    for params in block_params:
        h = transformer_block(h, params, n_head, scale=True,
                              q_block=q_block, kv_block=kv_block)
    return h


# --------------------------------------------------------------------------
# pure-JAX reference (for correctness check)
# --------------------------------------------------------------------------
def _reference_block(x, params, n_head, scale):
    (w_attn, b_attn, w_aproj, b_aproj, g1, bln1,
     w_fc, b_fc, w_proj, b_proj, g2, bln2) = params
    B, T, nx = x.shape
    hd = nx // n_head

    qkv = x @ w_attn + b_attn
    q, k, v = jnp.split(qkv, 3, axis=-1)
    sh = lambda t: t.reshape(B, T, n_head, hd).transpose(0, 2, 1, 3)
    q, k, v = sh(q), sh(k), sh(v)

    w = jnp.einsum('bhqd,bhkd->bhqk', q, k)
    if scale:
        w = w / math.sqrt(hd)
    mask = jnp.tril(jnp.ones((T, T), x.dtype))
    w = w * mask + (-1e9) * (1.0 - mask)
    w = jax.nn.softmax(w, axis=-1)
    a = jnp.einsum('bhqk,bhkd->bhqd', w, v)
    a = a.transpose(0, 2, 1, 3).reshape(B, T, nx)
    a = a @ w_aproj + b_aproj

    def ln(t, g, b, eps=1e-5):
        u = t.mean(-1, keepdims=True)
        s = ((t - u) ** 2).mean(-1, keepdims=True)
        return g * ((t - u) / jnp.sqrt(s + eps)) + b

    n = ln(x + a, g1, bln1)
    h1 = _gelu(n @ w_fc + b_fc)
    m = h1 @ w_proj + b_proj
    return ln(n + m, g2, bln2)


def reference_transformer(tokens, embed_w, block_params, n_head):
    e = embed_w[tokens]
    h = e.sum(axis=2)
    for params in block_params:
        h = _reference_block(h, params, n_head, scale=True)
    return h


# --------------------------------------------------------------------------
if __name__ == "__main__":
    # Full-f32 reference matmuls so the correctness check is meaningful.
    jax.config.update("jax_default_matmul_precision", "highest")

    # Small config: batch=2, two index slots (token+position),
    # n_embd=32, n_head=4, n_layer=2, vocab=64.
    B, K, nx, n_head, n_layer, vocab = 2, 2, 32, 4, 2, 64

    key = jax.random.PRNGKey(0)
    key, k_emb = jax.random.split(key)
    embed_w = 0.02 * jax.random.normal(k_emb, (vocab, nx), jnp.float32)

    block_params = []
    for _ in range(n_layer):
        key, k1, k2, k3, k4 = jax.random.split(key, 5)
        w_attn  = 0.02 * jax.random.normal(k1, (nx, 3 * nx), jnp.float32)
        b_attn  = jnp.zeros((1, 3 * nx), jnp.float32)
        w_aproj = 0.02 * jax.random.normal(k2, (nx, nx), jnp.float32)
        b_aproj = jnp.zeros((1, nx), jnp.float32)
        g1      = jnp.ones((1, nx), jnp.float32)
        bln1    = jnp.zeros((1, nx), jnp.float32)
        w_fc    = 0.02 * jax.random.normal(k3, (nx, 4 * nx), jnp.float32)
        b_fc    = jnp.zeros((1, 4 * nx), jnp.float32)
        w_proj  = 0.02 * jax.random.normal(k4, (4 * nx, nx), jnp.float32)
        b_proj  = jnp.zeros((1, nx), jnp.float32)
        g2      = jnp.ones((1, nx), jnp.float32)
        bln2    = jnp.zeros((1, nx), jnp.float32)
        block_params.append((w_attn, b_attn, w_aproj, b_aproj, g1, bln1,
                             w_fc, b_fc, w_proj, b_proj, g2, bln2))

    # ---- Test A: T=8 (single q/kv tile), f32 correctness --------------------
    T = 8
    key, k_tok = jax.random.split(key)
    tokens = jax.random.randint(k_tok, (B, T, K), 0, vocab, dtype=jnp.int32)
    out = transformer_model(tokens, embed_w, block_params, n_head)
    out = jax.block_until_ready(out)
    ref = reference_transformer(tokens, embed_w, block_params, n_head)
    assert out.shape == (B, T, nx)
    assert jnp.allclose(out, ref, atol=2e-3, rtol=2e-3), (
        "T=8 mismatch vs JAX reference: max abs err = "
        f"{jnp.max(jnp.abs(out - ref))}")

    # ---- Test B: T=32 with 8-wide q/kv tiles — exercises the online-softmax
    # flash loop (4 KV steps) and the causal block skip. ----------------------
    T2 = 32
    key, k_tok2 = jax.random.split(key)
    tokens2 = jax.random.randint(k_tok2, (B, T2, K), 0, vocab, dtype=jnp.int32)
    out2 = transformer_model(tokens2, embed_w, block_params, n_head,
                             q_block=8, kv_block=8)
    out2 = jax.block_until_ready(out2)
    ref2 = reference_transformer(tokens2, embed_w, block_params, n_head)
    assert out2.shape == (B, T2, nx)
    assert jnp.allclose(out2, ref2, atol=2e-3, rtol=2e-3), (
        "T=32 flash mismatch vs JAX reference: max abs err = "
        f"{jnp.max(jnp.abs(out2 - ref2))}")

    # ---- bf16 smoke run (bf16 matmul inputs, f32 accumulation) --------------
    h16 = jnp.take(embed_w, tokens2, axis=0).sum(axis=2).astype(jnp.bfloat16)
    for blk in block_params:
        blk16 = tuple(p.astype(jnp.bfloat16) for p in blk)
        h16 = transformer_block(h16, blk16, n_head, scale=True,
                                q_block=8, kv_block=8)
    h16 = jax.block_until_ready(h16)
    assert h16.shape == (B, T2, nx)
    assert bool(jnp.all(jnp.isfinite(h16.astype(jnp.float32))))

    print("KERNEL_OK")
</pallas_src>

<mosaic_0001>
module attributes {stable_mosaic.version = 11 : i64} {
  func.func @_qkv_proj_kernel(%arg0: i32, %arg1: i32, %arg2: memref<1x8x32xf32, #tpu.memory_space<vmem>>, %arg3: memref<32x96xf32, #tpu.memory_space<vmem>>, %arg4: memref<1x96xf32, #tpu.memory_space<vmem>>, %arg5: memref<1x8x96xf32, #tpu.memory_space<vmem>>) attributes {dimension_semantics = [#tpu.dimension_semantics<parallel>, #tpu.dimension_semantics<parallel>], iteration_bounds = array<i64: 2, 1>, scalar_prefetch = 0 : i64, scratch_operands = 0 : i64, tpu.core_type = #tpu.core_type<tc>, window_params = [{transform_indices = @transform_0, window_bounds = array<i64: 1, 8, 32>}, {pipeline_mode = #tpu.pipeline_mode<synchronous>, transform_indices = @transform_1, window_bounds = array<i64: 32, 96>}, {pipeline_mode = #tpu.pipeline_mode<synchronous>, transform_indices = @transform_2, window_bounds = array<i64: 1, 96>}, {transform_indices = @transform_3, window_bounds = array<i64: 1, 8, 96>}]} {
    %c0 = arith.constant 0 : index
    %c0_0 = arith.constant 0 : index
    %c0_1 = arith.constant 0 : index
    %0 = vector.load %arg2[%c0, %c0_0, %c0_1] : memref<1x8x32xf32, #tpu.memory_space<vmem>>, vector<1x8x32xf32>
    %1 = vector.shape_cast %0 : vector<1x8x32xf32> to vector<8x32xf32>
    %c0_2 = arith.constant 0 : index
    %c0_3 = arith.constant 0 : index
    %2 = vector.load %arg3[%c0_2, %c0_3] : memref<32x96xf32, #tpu.memory_space<vmem>>, vector<32x96xf32>
    %cst = arith.constant dense<0.000000e+00> : vector<8x96xf32>
    %3 = tpu.matmul %1, %2, %cst {dimension_numbers = #tpu.dot_dimension_numbers<[1], [0], [0], [1], [0, 0, 1, 1], [], []>, precision = #tpu.contract_precision<fp32>} : vector<8x32xf32>, vector<32x96xf32>, vector<8x96xf32> -> vector<8x96xf32>
    %c0_4 = arith.constant 0 : index
    %c0_5 = arith.constant 0 : index
    %4 = vector.load %arg4[%c0_4, %c0_5] : memref<1x96xf32, #tpu.memory_space<vmem>>, vector<1x96xf32>
    %5 = vector.broadcast %4 : vector<1x96xf32> to vector<8x96xf32>
    %6 = arith.addf %3, %5 : vector<8x96xf32>
    %c0_6 = arith.constant 0 : index
    %c0_7 = arith.constant 0 : index
    %c0_8 = arith.constant 0 : index
    %7 = vector.load %arg5[%c0_6, %c0_7, %c0_8] : memref<1x8x96xf32, #tpu.memory_space<vmem>>, vector<1x8x96xf32>
    %8 = vector.shape_cast %7 : vector<1x8x96xf32> to vector<8x96xf32>
    %9 = vector.shape_cast %6 : vector<8x96xf32> to vector<1x8x96xf32>
    tpu.vector_store %arg5[%c0_6, %c0_7, %c0_8], %9 {strides = array<i32>} : memref<1x8x96xf32, #tpu.memory_space<vmem>>, vector<1x8x96xf32>,
    return
  }
  func.func @transform_0(%arg0: i32, %arg1: i32) -> (i32, i32, i32) {
    %c0_i32 = arith.constant 0 : i32
    %c0_i32_0 = arith.constant 0 : i32
    return %arg0, %arg1, %c0_i32 : i32, i32, i32
  }
  func.func @transform_1(%arg0: i32, %arg1: i32) -> (i32, i32) {
    %c0_i32 = arith.constant 0 : i32
    %c0_i32_0 = arith.constant 0 : i32
    %c0_i32_1 = arith.constant 0 : i32
    return %c0_i32, %c0_i32_0 : i32, i32
  }
  func.func @transform_2(%arg0: i32, %arg1: i32) -> (i32, i32) {
    %c0_i32 = arith.constant 0 : i32
    %c0_i32_0 = arith.constant 0 : i32
    %c0_i32_1 = arith.constant 0 : i32
    return %c0_i32, %c0_i32_0 : i32, i32
  }
  func.func @transform_3(%arg0: i32, %arg1: i32) -> (i32, i32, i32) {
    %c0_i32 = arith.constant 0 : i32
    %c0_i32_0 = arith.constant 0 : i32
    return %arg0, %arg1, %c0_i32 : i32, i32, i32
  }
}

</mosaic_0001>

<llo_original>
// kernel: tpu_custom_call.1
$region0: #{tpu_custom_call.1}
  #allocation0 [shape = 'u32[]', space=smem, size = 0x4, offset = 0x4, fixed_abs, tag = 'smem constant byte address 0x4 - core index']
  #allocation1 [shape = 'u32[144,128]{1,0:T(1,128)}', space=vmem, size = 0x12000, scoped, tag = 'internal scratch']
  %s0 = inlined_call_operand.hbm [shape: f32[2,8,32], index: 0, kind: input, shape index: {}]
  %s1 = inlined_call_operand.hbm [shape: f32[32,96], index: 1, kind: input, shape index: {}]
  %s2 = inlined_call_operand.hbm [shape: f32[1,96], index: 2, kind: input, shape index: {}]
  %s3 = inlined_call_operand.hbm [shape: f32[2,8,96], index: 3, kind: output, shape index: {}]
  %s4 = sld [smem:[#allocation0]]
  $region57: #{tpu_custom_call.1} parent=0
    _
  %s6 = ssub.s32 1, %s4
  %s7 = scalar_select 0, %s6, %s4
  $region1: #{tpu_custom_call.1} parent=0
    #allocation2 [shape = 'u8[8192]{0}', space=vmem, size = 0x2000, scoped, tag = 'input window, operand 0']
    #allocation3 [shape = 's32[2]{0}', space=sflag, size = 0x8, scoped, tag = 'scoped memory for tpu_custom_call.1']
    #allocation4 [shape = 's32[2]{0}', space=sflag, size = 0x8, scoped, tag = 'scoped memory for tpu_custom_call.1']
    #allocation5 [shape = 'u8[16384]{0}', space=vmem, size = 0x4000, scoped, tag = 'input window, operand 1, single buffered']
    #allocation6 [shape = 's32[1]{0}', space=sflag, size = 0x4, scoped, tag = 'scoped memory for tpu_custom_call.1']
    #allocation7 [shape = 'u8[512]{0}', space=vmem, size = 0x400, scoped, tag = 'input window, operand 2, single buffered']
    #allocation8 [shape = 'u8[8192]{0}', space=vmem, size = 0x2000, scoped, tag = 'output window, operand 0']
    %8 = vsyncpa [#allocation3], 0
    %s9 = scalar_lea.sflag [#allocation3], 1
    %10 = vsyncpa %s9, 0
    %11 = vsyncpa [#allocation6], 0
    %12 = vsyncpa [#allocation4], 0
    %s13 = scalar_lea.sflag [#allocation4], 1
    %14 = vsyncpa %s13, 0
    loop: start=0, step=1, limit=4
    $region2: #{tpu_custom_call.1} parent=1 // loop_pre_header
      _
    $region3: #{tpu_custom_call.1} parent=1 // loop_header
      %s16 = sphi 0, %s20
      %p17 = scmp.ge.s32.totalorder %s16, 4
      %s23 = sphi 0, %s35
      %s24 = sphi 0, %s31
      %s25 = sphi 0, %s23
      %s26 = sphi 0, %s24
      %s27 = sphi 0, %s25
      %s28 = sphi 0, %s26
      %s40 = sphi 0, %s42
      %s43 = sphi 0, %s40
      %s44 = sphi 0, %s43
      %s60 = sphi 0, %s44
      %s64 = sphi 0, %s64
      %s66 = sphi 0, %s64
      %s67 = sphi 0, %s66
      %s81 = sphi 0, %s67
      %s85 = sphi 0, %s85
      %s87 = sphi 0, %s85
      %s88 = sphi 0, %s87
      %s102 = sphi 0, %s88
      %s110 = sphi 0, %s112
      %s113 = sphi 0, %s110
      %s114 = sphi 0, %s113
      %s130 = sphi 0, %s114
    $region4: #{tpu_custom_call.1} parent=1 // loop_header_branch
      %19 = sbr.rel (%p17) target = $region8
    $region5: #{tpu_custom_call.1} parent=1 // loop_body
      %s21 = ssub.s32 %s16, 1
      %s22 = ssub.s32 %s16, 2
      %s29 = sadd.s32 1, %s24
      %p30 = scmp.ge.s32.totalorder %s29, 1
      %s31 = scalar_select %p30, 0, %s29
      %s32 = sadd.s32 1, %s23
      %s33 = scalar_select %p30, %s32, %s23
      %p34 = scmp.ge.s32.totalorder %s33, 2
      %s35 = scalar_select %p34, 0, %s33
      %s36 = ssub.s32 %s23, %s35
      %s37 = ssub.s32 %s24, %s31
      %s38 = sor.u32 %s36, %s37
      %p39 = scmp.eq.s32.totalorder %s38, 0
      %s41 = sadd.s32 %s40, 1
      %s42 = scalar_select %p39, %s40, %s41
      %p45 = pneg %p39
      %p46 = scmp.eq.s32.totalorder %s16, 1
      %p47 = por %p45, %p46
      %p48 = scmp.ne.s32.totalorder %s40, %s43
      %p49 = scmp.eq.s32.totalorder %s16, 0
      %p50 = por %p48, %p49
      %p51 = scmp.ne.s32.totalorder %s40, %s43
      %p52 = scmp.eq.s32.totalorder %s21, 1
      %p53 = por %p51, %p52
      %p54 = scmp.ne.s32.totalorder %s43, %s44
      %p55 = scmp.eq.s32.totalorder %s21, 0
      %p56 = por %p54, %p55
      %p57 = scmp.ne.s32.totalorder %s43, %s44
      %p58 = scmp.eq.s32.totalorder %s22, 1
      %p59 = por %p57, %p58
      %p61 = scmp.ne.s32.totalorder %s44, %s60
      %p62 = scmp.eq.s32.totalorder %s22, 0
      %p63 = por %p61, %p62
      %s65 = sadd.s32 %s64, 1
      %p68 = scmp.eq.s32.totalorder %s16, 1
      %p69 = scmp.ne.s32.totalorder %s64, %s66
      %p70 = scmp.eq.s32.totalorder %s16, 0
      %p71 = por %p69, %p70
      %p72 = scmp.ne.s32.totalorder %s64, %s66
      %p73 = scmp.eq.s32.totalorder %s21, 1
      %p74 = por %p72, %p73
      %p75 = scmp.ne.s32.totalorder %s66, %s67
      %p76 = scmp.eq.s32.totalorder %s21, 0
      %p77 = por %p75, %p76
      %p78 = scmp.ne.s32.totalorder %s66, %s67
      %p79 = scmp.eq.s32.totalorder %s22, 1
      %p80 = por %p78, %p79
      %p82 = scmp.ne.s32.totalorder %s67, %s81
      %p83 = scmp.eq.s32.totalorder %s22, 0
      %p84 = por %p82, %p83
      %s86 = sadd.s32 %s85, 1
      %p89 = scmp.eq.s32.totalorder %s16, 1
      %p90 = scmp.ne.s32.totalorder %s85, %s87
      %p91 = scmp.eq.s32.totalorder %s16, 0
      %p92 = por %p90, %p91
      %p93 = scmp.ne.s32.totalorder %s85, %s87
      %p94 = scmp.eq.s32.totalorder %s21, 1
      %p95 = por %p93, %p94
      %p96 = scmp.ne.s32.totalorder %s87, %s88
      %p97 = scmp.eq.s32.totalorder %s21, 0
      %p98 = por %p96, %p97
      %p99 = scmp.ne.s32.totalorder %s87, %s88
      %p100 = scmp.eq.s32.totalorder %s22, 1
      %p101 = por %p99, %p100
      %p103 = scmp.ne.s32.totalorder %s88, %s102
      %p104 = scmp.eq.s32.totalorder %s22, 0
      %p105 = por %p103, %p104
      %s106 = ssub.s32 %s23, %s35
      %s107 = ssub.s32 %s24, %s31
      %s108 = sor.u32 %s106, %s107
      %p109 = scmp.eq.s32.totalorder %s108, 0
      %s111 = sadd.s32 %s110, 1
      %s112 = scalar_select %p109, %s110, %s111
      %p115 = pneg %p109
      %p116 = scmp.eq.s32.totalorder %s16, 1
      %p117 = por %p115, %p116
      %p118 = scmp.ne.s32.totalorder %s110, %s113
      %p119 = scmp.eq.s32.totalorder %s16, 0
      %p120 = por %p118, %p119
      %p121 = scmp.ne.s32.totalorder %s110, %s113
      %p122 = scmp.eq.s32.totalorder %s21, 1
      %p123 = por %p121, %p122
      %p124 = scmp.ne.s32.totalorder %s113, %s114
      %p125 = scmp.eq.s32.totalorder %s21, 0
      %p126 = por %p124, %p125
      %p127 = scmp.ne.s32.totalorder %s113, %s114
      %p128 = scmp.eq.s32.totalorder %s22, 1
      %p129 = por %p127, %p128
      %p131 = scmp.ne.s32.totalorder %s114, %s130
      %p132 = scmp.eq.s32.totalorder %s22, 0
      %p133 = por %p131, %p132
      %p134 = scmp.le.s32.totalorder 1, %s16
      %p135 = scmp.lt.s32.totalorder %s16, 3
      %p136 = pnand %p134, %p135
      %p137 = pneg %p136
      // Predicated region
      $region9: #{tpu_custom_call.1} parent=5 // pred_check
        _
      $region10: #{tpu_custom_call.1} parent=5 // pred_check_branch
        %139 = sbr.rel (%p136) target = $region12
      $region11: #{tpu_custom_call.1} parent=5 // pred_region
        %s140 = ssub.s32 %s16, 1
        // Predicated region
        $region13: #{tpu_custom_call.1} parent=11 // pred_check
          %p141 = pneg %p77
        $region14: #{tpu_custom_call.1} parent=11 // pred_check_branch
          %143 = sbr.rel (%p141) target = $region16
        $region15: #{tpu_custom_call.1} parent=11 // pred_region
          %s145 = ssub.s32 512, 512
          %146 = vsyncadd [#allocation6], %s145
          %s147 = sshll.u32 [#allocation5], 4
          %s148 = int_to_ptr.vmem [resolvable:$true] %s147
          %153 = dma.hbm_to_vmem [thread:$0]  %s1, 512, %s148, [#allocation6], 128, 128, 8
        $region16: #{tpu_custom_call.1} parent=11 // pred_fallthru
          _
        // Predicated region
        $region17: #{tpu_custom_call.1} parent=11 // pred_check
          %p154 = pneg %p98
        $region18: #{tpu_custom_call.1} parent=11 // pred_check_branch
          %156 = sbr.rel (%p154) target = $region20
        $region19: #{tpu_custom_call.1} parent=11 // pred_region
          %s158 = ssub.s32 16, 16
          %159 = vsyncadd [#allocation6], %s158
          %s161 = sshll.u32 [#allocation7], 4
          %s162 = int_to_ptr.vmem [resolvable:$true] %s161
          %164 = dma.hbm_to_vmem [thread:$0]  %s2, 16, %s162, [#allocation6]
        $region20: #{tpu_custom_call.1} parent=11 // pred_fallthru
          _
      $region12: #{tpu_custom_call.1} parent=5 // pred_fallthru
        _
      %p165 = scmp.lt.s32.totalorder %s16, 2
      // Predicated region
      $region21: #{tpu_custom_call.1} parent=5 // pred_check
        %p166 = pneg %p165
      $region22: #{tpu_custom_call.1} parent=5 // pred_check_branch
        %168 = sbr.rel (%p166) target = $region24
      $region23: #{tpu_custom_call.1} parent=5 // pred_region
        // Predicated region
        $region25: #{tpu_custom_call.1} parent=23 // pred_check
          %p169 = pneg %p50
        $region26: #{tpu_custom_call.1} parent=23 // pred_check_branch
          %171 = sbr.rel (%p169) target = $region28
        $region27: #{tpu_custom_call.1} parent=23 // pred_region
          %s172 = sand.u32 %s40, 1
          %s173 = scalar_lea.sflag [#allocation3], %s172
          %s174 = sand.u32 %s40, 1
          %s175 = smul.addr %s174, 8
          %s176 = scalar_lea.vmem [#allocation2], %s175
          %s178 = ssub.s32 128, 128
          %179 = vsyncadd %s173, %s178
          %s180 = sadd.s32 %s24, %s23
          %s181 = smul.addr %s180, 128
          %s182 = scalar_lea.hbm %s0, %s181
          %s184 = sshll.u32 %s176, 4
          %s185 = int_to_ptr.vmem [resolvable:$true] %s184
          %187 = dma.hbm_to_vmem [thread:$0]  %s182, 128, %s185, %s173
        $region28: #{tpu_custom_call.1} parent=23 // pred_fallthru
          _
      $region24: #{tpu_custom_call.1} parent=5 // pred_fallthru
        _
      %p188 = scmp.le.s32.totalorder 1, %s16
      %p189 = scmp.lt.s32.totalorder %s16, 3
      %p190 = pnand %p188, %p189
      %p191 = pneg %p190
      // Predicated region
      $region29: #{tpu_custom_call.1} parent=5 // pred_check
        _
      $region30: #{tpu_custom_call.1} parent=5 // pred_check_branch
        %193 = sbr.rel (%p190) target = $region32
      $region31: #{tpu_custom_call.1} parent=5 // pred_region
        %s194 = ssub.s32 %s16, 1
        %s195 = sand.u32 %s43, 1
        %s196 = scalar_lea.sflag [#allocation3], %s195
        %s197 = sand.u32 %s43, 1
        %s198 = smul.addr %s197, 8
        %s199 = scalar_lea.vmem [#allocation2], %s198
        // Predicated region
        $region33: #{tpu_custom_call.1} parent=31 // pred_check
          %p200 = pneg %p56
        $region34: #{tpu_custom_call.1} parent=31 // pred_check_branch
          %202 = sbr.rel (%p200) target = $region36
        $region35: #{tpu_custom_call.1} parent=31 // pred_region
          %203 = dma.done %s196, 128
        $region36: #{tpu_custom_call.1} parent=31 // pred_fallthru
          _
        // Predicated region
        $region37: #{tpu_custom_call.1} parent=31 // pred_check
          %p204 = pneg %p77
        $region38: #{tpu_custom_call.1} parent=31 // pred_check_branch
          %206 = sbr.rel (%p204) target = $region40
        $region39: #{tpu_custom_call.1} parent=31 // pred_region
          %207 = dma.done [#allocation6], 512
        $region40: #{tpu_custom_call.1} parent=31 // pred_fallthru
          _
        // Predicated region
        $region41: #{tpu_custom_call.1} parent=31 // pred_check
          %p208 = pneg %p98
        $region42: #{tpu_custom_call.1} parent=31 // pred_check_branch
          %210 = sbr.rel (%p208) target = $region44
        $region43: #{tpu_custom_call.1} parent=31 // pred_region
          %211 = dma.done [#allocation6], 16
        $region44: #{tpu_custom_call.1} parent=31 // pred_fallthru
          _
        %s212 = sand.u32 %s43, 1
        %s213 = scalar_lea.sflag [#allocation3], %s212
        %s214 = sand.u32 %s43, 1
        %s215 = smul.addr %s214, 8
        %s216 = scalar_lea.vmem [#allocation2], %s215
        %p217 = pneg %p56
        %p218 = pneg %p53
        %p219 = pneg %p77
        %p220 = pneg %p74
        %p221 = pneg %p98
        %p222 = pneg %p95
        %p223 = pneg %p126
        %p224 = pneg %p123
        %s225 = sand.u32 %s113, 1
        %s226 = scalar_lea.sflag [#allocation4], %s225
        %s227 = sand.u32 %s113, 1
        %s228 = smul.addr %s227, 8
        %s229 = scalar_lea.vmem [#allocation8], %s228
        %v230 = vld [vmem:[%s199] sm:$0xff]
        %v231 = vld [vmem:[#allocation5] sm:$0xff]
        %v232 = vld [vmem:[#allocation5 + $0x8] sm:$0xff]
        %v233 = vld [vmem:[#allocation5 + $0x10] sm:$0xff]
        %v234 = vld [vmem:[#allocation5 + $0x18] sm:$0xff]
        %v235 = vld [vmem:[#allocation7] sm:$0x1]
        %v237 = vlaneseq
        %v238 = vshrl.u32 %v237, 7
        %v239 = vsub.s32 0, %v238
        %v240 = vrot.slane %v235, %v239
        %vm242 = vcmask 261120
        %v244 = vsel %vm242, %v230, 0
        %246 = vmatprep.subr.mxu0 0.0
        %v247 = vand.u32 %v231, 4294901760
        %248 = vmatpush1.msra.mxu0 %v247
        %249 = vmatprep.subr.mxu0 0.0
        %v250 = vand.u32 %v232, 4294901760
        %251 = vmatpush1.msra.mxu0 %v250
        %252 = vmatprep.subr.mxu0 0.0
        %v253 = vand.u32 %v233, 4294901760
        %254 = vmatpush1.msra.mxu0 %v253
        %255 = vmatprep.subr.mxu0 0.0
        %v256 = vand.u32 %v234, 4294901760
        %257 = vmatpush1.msra.mxu0 %v256
        %258 = vmatprep.subr.mxu0 0.0
        %259 = vmatpush1.msra.mxu0 0.0
        %260 = vmatprep.subr.mxu0 0.0
        %261 = vmatpush1.msra.mxu0 0.0
        %262 = vmatprep.subr.mxu0 0.0
        %263 = vmatpush1.msra.mxu0 0.0
        %264 = vmatprep.subr.mxu0 0.0
        %265 = vmatpush1.msra.mxu0 0.0
        %266 = vmatprep.subr.mxu0 0.0
        %267 = vmatpush1.msra.mxu0 0.0
        %268 = vmatprep.subr.mxu0 0.0
        %269 = vmatpush1.msra.mxu0 0.0
        %270 = vmatprep.subr.mxu0 0.0
        %271 = vmatpush1.msra.mxu0 0.0
        %272 = vmatprep.subr.mxu0 0.0
        %273 = vmatpush1.msra.mxu0 0.0
        %274 = vmatprep.subr.mxu0 0.0
        %275 = vmatpush1.msra.mxu0 0.0
        %276 = vmatprep.subr.mxu0 0.0
        %277 = vmatpush1.msra.mxu0 0.0
        %278 = vmatprep.subr.mxu0 0.0
        %279 = vmatpush1.msra.mxu0 0.0
        %280 = vmatprep.subr.mxu0 0.0
        %281 = vmatpush1.msra.mxu0 0.0
        %282 = vmatprep.subr.mxu0 0.0
        %283 = vmatpush1.msra.mxu0 0.0
        %284 = vmatprep.subr.mxu0 0.0
        %285 = vmatpush1.msra.mxu0 0.0
        %286 = vmatprep.subr.mxu0 0.0
        %287 = vmatpush1.msra.mxu0 0.0
        %288 = vmatprep.subr.mxu0 0.0
        %289 = vmatpush1.msra.mxu0 0.0
        %290 = vmatprep.subr.mxu0 0.0
        %291 = vmatpush1.msra.mxu0 0.0
        %292 = vmatprep.subr.mxu0 0.0
        %293 = vmatpush1.msra.mxu0 0.0
        %294 = vmatprep.subr.mxu0 0.0
        %295 = vmatpush1.msra.mxu0 0.0
        %296 = vmatprep.subr.mxu0 0.0
        %297 = vmatpush1.msra.mxu0 0.0
        %298 = vmatprep.subr.mxu0 0.0
        %299 = vmatpush1.msra.mxu0 0.0
        %300 = vmatprep.subr.mxu0 0.0
        %301 = vmatpush1.msra.mxu0 0.0
        %302 = vmatprep.subr.mxu0 0.0
        %303 = vmatpush1.msra.mxu0 0.0
        %304 = vmatprep.subr.mxu0 0.0
        %305 = vmatpush1.msra.mxu0 0.0
        %306 = vmatprep.subr.mxu0 0.0
        %307 = vmatpush1.msra.mxu0 0.0
        %308 = vmatprep.subr.mxu0 0.0
        %309 = vmatpush1.msra.mxu0 0.0
        %310 = vmatprep.subr.mxu0 0.0
        %311 = vmatpush1.msra.mxu0 0.0
        %312 = vmatprep.subr.mxu0 0.0
        %313 = vmatpush1.msra.mxu0 0.0
        %314 = vmatprep.mubr.f32.mxu0 0.0
        %v315 = vand.u32 %v244, 4294901760
        %v316 = vsub.f32 %v244, %v315
        %v317 = vand.u32 %v316, 4294901760
        %v318 = vsub.f32 %v316, %v317
        %v319 = vand.u32 %v318, 4294901760
        %320 = vmatmul.mubr.f32.gmra.mrb[0].mxu0 %v319
        %v321 = vpop.f32.mrb[0].mxu0
        %v322 = vadd.f32 %v240, %v321
        %v323 = vpop.f32.mrb[0].mxu0
        %324 = vdwg.mxu0
        %325 = vmatprep.subr.mxu0 0.0
        %v326 = vand.u32 %v231, 4294901760
        %v327 = vsub.f32 %v231, %v326
        %v328 = vand.u32 %v327, 4294901760
        %v329 = vsub.f32 %v327, %v328
        %v330 = vand.u32 %v329, 4294901760
        %331 = vmatpush1.msra.mxu0 %v330
        %332 = vmatprep.subr.mxu0 0.0
        %v333 = vand.u32 %v232, 4294901760
        %v334 = vsub.f32 %v232, %v333
        %v335 = vand.u32 %v334, 4294901760
        %v336 = vsub.f32 %v334, %v335
        %v337 = vand.u32 %v336, 4294901760
        %338 = vmatpush1.msra.mxu0 %v337
        %339 = vmatprep.subr.mxu0 0.0
        %v340 = vand.u32 %v233, 4294901760
        %v341 = vsub.f32 %v233, %v340
        %v342 = vand.u32 %v341, 4294901760
        %v343 = vsub.f32 %v341, %v342
        %v344 = vand.u32 %v343, 4294901760
        %345 = vmatpush1.msra.mxu0 %v344
        %346 = vmatprep.subr.mxu0 0.0
        %v347 = vand.u32 %v234, 4294901760
        %v348 = vsub.f32 %v234, %v347
        %v349 = vand.u32 %v348, 4294901760
        %v350 = vsub.f32 %v348, %v349
        %v351 = vand.u32 %v350, 4294901760
        %352 = vmatpush1.msra.mxu0 %v351
        %353 = vmatprep.subr.mxu0 0.0
        %354 = vmatpush1.msra.mxu0 0.0
        %355 = vmatprep.subr.mxu0 0.0
        %356 = vmatpush1.msra.mxu0 0.0
        %357 = vmatprep.subr.mxu0 0.0
        %358 = vmatpush1.msra.mxu0 0.0
        %359 = vmatprep.subr.mxu0 0.0
        %360 = vmatpush1.msra.mxu0 0.0
        %361 = vmatprep.subr.mxu0 0.0
        %362 = vmatpush1.msra.mxu0 0.0
        %363 = vmatprep.subr.mxu0 0.0
        %364 = vmatpush1.msra.mxu0 0.0
        %365 = vmatprep.subr.mxu0 0.0
        %366 = vmatpush1.msra.mxu0 0.0
        %367 = vmatprep.subr.mxu0 0.0
        %368 = vmatpush1.msra.mxu0 0.0
        %369 = vmatprep.subr.mxu0 0.0
        %370 = vmatpush1.msra.mxu0 0.0
        %371 = vmatprep.subr.mxu0 0.0
        %372 = vmatpush1.msra.mxu0 0.0
        %373 = vmatprep.subr.mxu0 0.0
        %374 = vmatpush1.msra.mxu0 0.0
        %375 = vmatprep.subr.mxu0 0.0
        %376 = vmatpush1.msra.mxu0 0.0
        %377 = vmatprep.subr.mxu0 0.0
        %378 = vmatpush1.msra.mxu0 0.0
        %379 = vmatprep.subr.mxu0 0.0
        %380 = vmatpush1.msra.mxu0 0.0
        %381 = vmatprep.subr.mxu0 0.0
        %382 = vmatpush1.msra.mxu0 0.0
        %383 = vmatprep.subr.mxu0 0.0
        %384 = vmatpush1.msra.mxu0 0.0
        %385 = vmatprep.subr.mxu0 0.0
        %386 = vmatpush1.msra.mxu0 0.0
        %387 = vmatprep.subr.mxu0 0.0
        %388 = vmatpush1.msra.mxu0 0.0
        %389 = vmatprep.subr.mxu0 0.0
        %390 = vmatpush1.msra.mxu0 0.0
        %391 = vmatprep.subr.mxu0 0.0
        %392 = vmatpush1.msra.mxu0 0.0
        %393 = vmatprep.subr.mxu0 0.0
        %394 = vmatpush1.msra.mxu0 0.0
        %395 = vmatprep.subr.mxu0 0.0
        %396 = vmatpush1.msra.mxu0 0.0
        %397 = vmatprep.subr.mxu0 0.0
        %398 = vmatpush1.msra.mxu0 0.0
        %399 = vmatprep.subr.mxu0 0.0
        %400 = vmatpush1.msra.mxu0 0.0
        %401 = vmatprep.subr.mxu0 0.0
        %402 = vmatpush1.msra.mxu0 0.0
        %403 = vmatprep.subr.mxu0 0.0
        %404 = vmatpush1.msra.mxu0 0.0
        %405 = vmatprep.subr.mxu0 0.0
        %406 = vmatpush1.msra.mxu0 0.0
        %407 = vmatprep.subr.mxu0 0.0
        %408 = vmatpush1.msra.mxu0 0.0
        %409 = vmatprep.mubr.f32.mxu0 0.0
        %v410 = vand.u32 %v244, 4294901760
        %411 = vmatmul.mubr.f32.gmra.mrb[0].mxu0 %v410
        %v412 = vpop.f32.mrb[0].mxu0
        %v413 = vadd.f32 %v322, %v412
        %v414 = vpop.f32.mrb[0].mxu0
        %415 = vdwg.mxu0
        %416 = vmatprep.subr.mxu0 0.0
        %v417 = vand.u32 %v231, 4294901760
        %v418 = vsub.f32 %v231, %v417
        %419 = vmatpush1.msra.mxu0 %v418
        %420 = vmatprep.subr.mxu0 0.0
        %v421 = vand.u32 %v232, 4294901760
        %v422 = vsub.f32 %v232, %v421
        %423 = vmatpush1.msra.mxu0 %v422
        %424 = vmatprep.subr.mxu0 0.0
        %v425 = vand.u32 %v233, 4294901760
        %v426 = vsub.f32 %v233, %v425
        %427 = vmatpush1.msra.mxu0 %v426
        %428 = vmatprep.subr.mxu0 0.0
        %v429 = vand.u32 %v234, 4294901760
        %v430 = vsub.f32 %v234, %v429
        %431 = vmatpush1.msra.mxu0 %v430
        %432 = vmatprep.subr.mxu0 0.0
        %433 = vmatpush1.msra.mxu0 0.0
        %434 = vmatprep.subr.mxu0 0.0
        %435 = vmatpush1.msra.mxu0 0.0
        %436 = vmatprep.subr.mxu0 0.0
        %437 = vmatpush1.msra.mxu0 0.0
        %438 = vmatprep.subr.mxu0 0.0
        %439 = vmatpush1.msra.mxu0 0.0
        %440 = vmatprep.subr.mxu0 0.0
        %441 = vmatpush1.msra.mxu0 0.0
        %442 = vmatprep.subr.mxu0 0.0
        %443 = vmatpush1.msra.mxu0 0.0
        %444 = vmatprep.subr.mxu0 0.0
        %445 = vmatpush1.msra.mxu0 0.0
        %446 = vmatprep.subr.mxu0 0.0
        %447 = vmatpush1.msra.mxu0 0.0
        %448 = vmatprep.subr.mxu0 0.0
        %449 = vmatpush1.msra.mxu0 0.0
        %450 = vmatprep.subr.mxu0 0.0
        %451 = vmatpush1.msra.mxu0 0.0
        %452 = vmatprep.subr.mxu0 0.0
        %453 = vmatpush1.msra.mxu0 0.0
        %454 = vmatprep.subr.mxu0 0.0
        %455 = vmatpush1.msra.mxu0 0.0
        %456 = vmatprep.subr.mxu0 0.0
        %457 = vmatpush1.msra.mxu0 0.0
        %458 = vmatprep.subr.mxu0 0.0
        %459 = vmatpush1.msra.mxu0 0.0
        %460 = vmatprep.subr.mxu0 0.0
        %461 = vmatpush1.msra.mxu0 0.0
        %462 = vmatprep.subr.mxu0 0.0
        %463 = vmatpush1.msra.mxu0 0.0
        %464 = vmatprep.subr.mxu0 0.0
        %465 = vmatpush1.msra.mxu0 0.0
        %466 = vmatprep.subr.mxu0 0.0
        %467 = vmatpush1.msra.mxu0 0.0
        %468 = vmatprep.subr.mxu0 0.0
        %469 = vmatpush1.msra.mxu0 0.0
        %470 = vmatprep.subr.mxu0 0.0
        %471 = vmatpush1.msra.mxu0 0.0
        %472 = vmatprep.subr.mxu0 0.0
        %473 = vmatpush1.msra.mxu0 0.0
        %474 = vmatprep.subr.mxu0 0.0
        %475 = vmatpush1.msra.mxu0 0.0
        %476 = vmatprep.subr.mxu0 0.0
        %477 = vmatpush1.msra.mxu0 0.0
        %478 = vmatprep.subr.mxu0 0.0
        %479 = vmatpush1.msra.mxu0 0.0
        %480 = vmatprep.subr.mxu0 0.0
        %481 = vmatpush1.msra.mxu0 0.0
        %482 = vmatprep.subr.mxu0 0.0
        %483 = vmatpush1.msra.mxu0 0.0
        %484 = vmatprep.subr.mxu0 0.0
        %485 = vmatpush1.msra.mxu0 0.0
        %486 = vmatprep.subr.mxu0 0.0
        %487 = vmatpush1.msra.mxu0 0.0
        %488 = vmatprep.mubr.f32.mxu0 0.0
        %v489 = vand.u32 %v244, 4294901760
        %v490 = vsub.f32 %v244, %v489
        %491 = vmatmul.mubr.f32.gmra.mrb[0].mxu0 %v490
        %v492 = vpop.f32.mrb[0].mxu0
        %v493 = vadd.f32 %v413, %v492
        %v494 = vpop.f32.mrb[0].mxu0
        %495 = vdwg.mxu0
        %496 = vmatprep.subr.mxu0 0.0
        %v497 = vand.u32 %v231, 4294901760
        %498 = vmatpush1.msra.mxu0 %v497
        %499 = vmatprep.subr.mxu0 0.0
        %v500 = vand.u32 %v232, 4294901760
        %501 = vmatpush1.msra.mxu0 %v500
        %502 = vmatprep.subr.mxu0 0.0
        %v503 = vand.u32 %v233, 4294901760
        %504 = vmatpush1.msra.mxu0 %v503
        %505 = vmatprep.subr.mxu0 0.0
        %v506 = vand.u32 %v234, 4294901760
        %507 = vmatpush1.msra.mxu0 %v506
        %508 = vmatprep.subr.mxu0 0.0
        %509 = vmatpush1.msra.mxu0 0.0
        %510 = vmatprep.subr.mxu0 0.0
        %511 = vmatpush1.msra.mxu0 0.0
        %512 = vmatprep.subr.mxu0 0.0
        %513 = vmatpush1.msra.mxu0 0.0
        %514 = vmatprep.subr.mxu0 0.0
        %515 = vmatpush1.msra.mxu0 0.0
        %516 = vmatprep.subr.mxu0 0.0
        %517 = vmatpush1.msra.mxu0 0.0
        %518 = vmatprep.subr.mxu0 0.0
        %519 = vmatpush1.msra.mxu0 0.0
        %520 = vmatprep.subr.mxu0 0.0
        %521 = vmatpush1.msra.mxu0 0.0
        %522 = vmatprep.subr.mxu0 0.0
        %523 = vmatpush1.msra.mxu0 0.0
        %524 = vmatprep.subr.mxu0 0.0
        %525 = vmatpush1.msra.mxu0 0.0
        %526 = vmatprep.subr.mxu0 0.0
        %527 = vmatpush1.msra.mxu0 0.0
        %528 = vmatprep.subr.mxu0 0.0
        %529 = vmatpush1.msra.mxu0 0.0
        %530 = vmatprep.subr.mxu0 0.0
        %531 = vmatpush1.msra.mxu0 0.0
        %532 = vmatprep.subr.mxu0 0.0
        %533 = vmatpush1.msra.mxu0 0.0
        %534 = vmatprep.subr.mxu0 0.0
        %535 = vmatpush1.msra.mxu0 0.0
        %536 = vmatprep.subr.mxu0 0.0
        %537 = vmatpush1.msra.mxu0 0.0
        %538 = vmatprep.subr.mxu0 0.0
        %539 = vmatpush1.msra.mxu0 0.0
        %540 = vmatprep.subr.mxu0 0.0
        %541 = vmatpush1.msra.mxu0 0.0
        %542 = vmatprep.subr.mxu0 0.0
        %543 = vmatpush1.msra.mxu0 0.0
        %544 = vmatprep.subr.mxu0 0.0
        %545 = vmatpush1.msra.mxu0 0.0
        %546 = vmatprep.subr.mxu0 0.0
        %547 = vmatpush1.msra.mxu0 0.0
        %548 = vmatprep.subr.mxu0 0.0
        %549 = vmatpush1.msra.mxu0 0.0
        %550 = vmatprep.subr.mxu0 0.0
        %551 = vmatpush1.msra.mxu0 0.0
        %552 = vmatprep.subr.mxu0 0.0
        %553 = vmatpush1.msra.mxu0 0.0
        %554 = vmatprep.subr.mxu0 0.0
        %555 = vmatpush1.msra.mxu0 0.0
        %556 = vmatprep.subr.mxu0 0.0
        %557 = vmatpush1.msra.mxu0 0.0
        %558 = vmatprep.subr.mxu0 0.0
        %559 = vmatpush1.msra.mxu0 0.0
        %560 = vmatprep.subr.mxu0 0.0
        %561 = vmatpush1.msra.mxu0 0.0
        %562 = vmatprep.subr.mxu0 0.0
        %563 = vmatpush1.msra.mxu0 0.0
        %564 = vmatprep.mubr.f32.mxu0 0.0
        %v565 = vand.u32 %v244, 4294901760
        %v566 = vsub.f32 %v244, %v565
        %v567 = vand.u32 %v566, 4294901760
        %568 = vmatmul.mubr.f32.gmra.mrb[0].mxu0 %v567
        %v569 = vpop.f32.mrb[0].mxu0
        %v570 = vadd.f32 %v493, %v569
        %v571 = vpop.f32.mrb[0].mxu0
        %572 = vdwg.mxu0
        %573 = vmatprep.subr.mxu0 0.0
        %v574 = vand.u32 %v231, 4294901760
        %v575 = vsub.f32 %v231, %v574
        %v576 = vand.u32 %v575, 4294901760
        %577 = vmatpush1.msra.mxu0 %v576
        %578 = vmatprep.subr.mxu0 0.0
        %v579 = vand.u32 %v232, 4294901760
        %v580 = vsub.f32 %v232, %v579
        %v581 = vand.u32 %v580, 4294901760
        %582 = vmatpush1.msra.mxu0 %v581
        %583 = vmatprep.subr.mxu0 0.0
        %v584 = vand.u32 %v233, 4294901760
        %v585 = vsub.f32 %v233, %v584
        %v586 = vand.u32 %v585, 4294901760
        %587 = vmatpush1.msra.mxu0 %v586
        %588 = vmatprep.subr.mxu0 0.0
        %v589 = vand.u32 %v234, 4294901760
        %v590 = vsub.f32 %v234, %v589
        %v591 = vand.u32 %v590, 4294901760
        %592 = vmatpush1.msra.mxu0 %v591
        %593 = vmatprep.subr.mxu0 0.0
        %594 = vmatpush1.msra.mxu0 0.0
        %595 = vmatprep.subr.mxu0 0.0
        %596 = vmatpush1.msra.mxu0 0.0
        %597 = vmatprep.subr.mxu0 0.0
        %598 = vmatpush1.msra.mxu0 0.0
        %599 = vmatprep.subr.mxu0 0.0
        %600 = vmatpush1.msra.mxu0 0.0
        %601 = vmatprep.subr.mxu0 0.0
        %602 = vmatpush1.msra.mxu0 0.0
        %603 = vmatprep.subr.mxu0 0.0
        %604 = vmatpush1.msra.mxu0 0.0
        %605 = vmatprep.subr.mxu0 0.0
        %606 = vmatpush1.msra.mxu0 0.0
        %607 = vmatprep.subr.mxu0 0.0
        %608 = vmatpush1.msra.mxu0 0.0
        %609 = vmatprep.subr.mxu0 0.0
        %610 = vmatpush1.msra.mxu0 0.0
        %611 = vmatprep.subr.mxu0 0.0
        %612 = vmatpush1.msra.mxu0 0.0
        %613 = vmatprep.subr.mxu0 0.0
        %614 = vmatpush1.msra.mxu0 0.0
        %615 = vmatprep.subr.mxu0 0.0
        %616 = vmatpush1.msra.mxu0 0.0
        %617 = vmatprep.subr.mxu0 0.0
        %618 = vmatpush1.msra.mxu0 0.0
        %619 = vmatprep.subr.mxu0 0.0
        %620 = vmatpush1.msra.mxu0 0.0
        %621 = vmatprep.subr.mxu0 0.0
        %622 = vmatpush1.msra.mxu0 0.0
        %623 = vmatprep.subr.mxu0 0.0
        %624 = vmatpush1.msra.mxu0 0.0
        %625 = vmatprep.subr.mxu0 0.0
        %626 = vmatpush1.msra.mxu0 0.0
        %627 = vmatprep.subr.mxu0 0.0
        %628 = vmatpush1.msra.mxu0 0.0
        %629 = vmatprep.subr.mxu0 0.0
        %630 = vmatpush1.msra.mxu0 0.0
        %631 = vmatprep.subr.mxu0 0.0
        %632 = vmatpush1.msra.mxu0 0.0
        %633 = vmatprep.subr.mxu0 0.0
        %634 = vmatpush1.msra.mxu0 0.0
        %635 = vmatprep.subr.mxu0 0.0
        %636 = vmatpush1.msra.mxu0 0.0
        %637 = vmatprep.subr.mxu0 0.0
        %638 = vmatpush1.msra.mxu0 0.0
        %639 = vmatprep.subr.mxu0 0.0
        %640 = vmatpush1.msra.mxu0 0.0
        %641 = vmatprep.subr.mxu0 0.0
        %642 = vmatpush1.msra.mxu0 0.0
        %643 = vmatprep.subr.mxu0 0.0
        %644 = vmatpush1.msra.mxu0 0.0
        %645 = vmatprep.subr.mxu0 0.0
        %646 = vmatpush1.msra.mxu0 0.0
        %647 = vmatprep.subr.mxu0 0.0
        %648 = vmatpush1.msra.mxu0 0.0
        %649 = vmatprep.mubr.f32.mxu0 0.0
        %v650 = vand.u32 %v244, 4294901760
        %651 = vmatmul.mubr.f32.gmra.mrb[0].mxu0 %v650
        %v652 = vpop.f32.mrb[0].mxu0
        %v653 = vadd.f32 %v570, %v652
        %v654 = vpop.f32.mrb[0].mxu0
        %655 = vdwg.mxu0
        %656 = vmatprep.subr.mxu0 0.0
        %v657 = vand.u32 %v231, 4294901760
        %658 = vmatpush1.msra.mxu0 %v657
        %659 = vmatprep.subr.mxu0 0.0
        %v660 = vand.u32 %v232, 4294901760
        %661 = vmatpush1.msra.mxu0 %v660
        %662 = vmatprep.subr.mxu0 0.0
        %v663 = vand.u32 %v233, 4294901760
        %664 = vmatpush1.msra.mxu0 %v663
        %665 = vmatprep.subr.mxu0 0.0
        %v666 = vand.u32 %v234, 4294901760
        %667 = vmatpush1.msra.mxu0 %v666
        %668 = vmatprep.subr.mxu0 0.0
        %669 = vmatpush1.msra.mxu0 0.0
        %670 = vmatprep.subr.mxu0 0.0
        %671 = vmatpush1.msra.mxu0 0.0
        %672 = vmatprep.subr.mxu0 0.0
        %673 = vmatpush1.msra.mxu0 0.0
        %674 = vmatprep.subr.mxu0 0.0
        %675 = vmatpush1.msra.mxu0 0.0
        %676 = vmatprep.subr.mxu0 0.0
        %677 = vmatpush1.msra.mxu0 0.0
        %678 = vmatprep.subr.mxu0 0.0
        %679 = vmatpush1.msra.mxu0 0.0
        %680 = vmatprep.subr.mxu0 0.0
        %681 = vmatpush1.msra.mxu0 0.0
        %682 = vmatprep.subr.mxu0 0.0
        %683 = vmatpush1.msra.mxu0 0.0
        %684 = vmatprep.subr.mxu0 0.0
        %685 = vmatpush1.msra.mxu0 0.0
        %686 = vmatprep.subr.mxu0 0.0
        %687 = vmatpush1.msra.mxu0 0.0
        %688 = vmatprep.subr.mxu0 0.0
        %689 = vmatpush1.msra.mxu0 0.0
        %690 = vmatprep.subr.mxu0 0.0
        %691 = vmatpush1.msra.mxu0 0.0
        %692 = vmatprep.subr.mxu0 0.0
        %693 = vmatpush1.msra.mxu0 0.0
        %694 = vmatprep.subr.mxu0 0.0
        %695 = vmatpush1.msra.mxu0 0.0
        %696 = vmatprep.subr.mxu0 0.0
        %697 = vmatpush1.msra.mxu0 0.0
        %698 = vmatprep.subr.mxu0 0.0
        %699 = vmatpush1.msra.mxu0 0.0
        %700 = vmatprep.subr.mxu0 0.0
        %701 = vmatpush1.msra.mxu0 0.0
        %702 = vmatprep.subr.mxu0 0.0
        %703 = vmatpush1.msra.mxu0 0.0
        %704 = vmatprep.subr.mxu0 0.0
        %705 = vmatpush1.msra.mxu0 0.0
        %706 = vmatprep.subr.mxu0 0.0
        %707 = vmatpush1.msra.mxu0 0.0
        %708 = vmatprep.subr.mxu0 0.0
        %709 = vmatpush1.msra.mxu0 0.0
        %710 = vmatprep.subr.mxu0 0.0
        %711 = vmatpush1.msra.mxu0 0.0
        %712 = vmatprep.subr.mxu0 0.0
        %713 = vmatpush1.msra.mxu0 0.0
        %714 = vmatprep.subr.mxu0 0.0
        %715 = vmatpush1.msra.mxu0 0.0
        %716 = vmatprep.subr.mxu0 0.0
        %717 = vmatpush1.msra.mxu0 0.0
        %718 = vmatprep.subr.mxu0 0.0
        %719 = vmatpush1.msra.mxu0 0.0
        %720 = vmatprep.subr.mxu0 0.0
        %721 = vmatpush1.msra.mxu0 0.0
        %722 = vmatprep.subr.mxu0 0.0
        %723 = vmatpush1.msra.mxu0 0.0
        %724 = vmatprep.mubr.f32.mxu0 0.0
        %v725 = vand.u32 %v244, 4294901760
        %726 = vmatmul.mubr.f32.gmra.mrb[0].mxu0 %v725
        %v727 = vpop.f32.mrb[0].mxu0
        %v728 = vadd.f32 %v653, %v727
        %v729 = vpop.f32.mrb[0].mxu0
        %730 = vdwg.mxu0
        %vm731 = vcmask 785408
        %732 = vst.msk [vmem:[%s229] sm:$0xff] %vm731, %v728
        %s733 = sand.u32 %s113, 1
        %s734 = scalar_lea.sflag [#allocation4], %s733
        %s735 = sand.u32 %s113, 1
        %s736 = smul.addr %s735, 8
        %s737 = scalar_lea.vmem [#allocation8], %s736
        // Predicated region
        $region45: #{tpu_custom_call.1} parent=31 // pred_check
          %p738 = pneg %p123
        $region46: #{tpu_custom_call.1} parent=31 // pred_check_branch
          %740 = sbr.rel (%p738) target = $region48
        $region47: #{tpu_custom_call.1} parent=31 // pred_region
          %s742 = ssub.s32 128, 128
          %743 = vsyncadd %s734, %s742
          %s744 = sadd.s32 %s26, %s25
          %s745 = smul.addr %s744, 128
          %s746 = scalar_lea.hbm %s3, %s745
          %s748 = sshll.u32 %s737, 4
          %s749 = int_to_ptr.vmem [resolvable:$true] %s748
          %751 = dma.vmem_to_hbm [thread:$0]  %s749, 128, %s746, %s734
        $region48: #{tpu_custom_call.1} parent=31 // pred_fallthru
          _
      $region32: #{tpu_custom_call.1} parent=5 // pred_fallthru
        _
      %p752 = scmp.le.s32.totalorder 2, %s16
      // Predicated region
      $region49: #{tpu_custom_call.1} parent=5 // pred_check
        %p753 = pneg %p752
      $region50: #{tpu_custom_call.1} parent=5 // pred_check_branch
        %755 = sbr.rel (%p753) target = $region52
      $region51: #{tpu_custom_call.1} parent=5 // pred_region
        %s756 = ssub.s32 %s16, 2
        // Predicated region
        $region53: #{tpu_custom_call.1} parent=51 // pred_check
          %p757 = pneg %p129
        $region54: #{tpu_custom_call.1} parent=51 // pred_check_branch
          %759 = sbr.rel (%p757) target = $region56
        $region55: #{tpu_custom_call.1} parent=51 // pred_region
          %s760 = sand.u32 %s114, 1
          %s761 = scalar_lea.sflag [#allocation4], %s760
          %s762 = sand.u32 %s114, 1
          %s763 = smul.addr %s762, 8
          %s764 = scalar_lea.vmem [#allocation8], %s763
          %765 = dma.done %s761, 128
        $region56: #{tpu_custom_call.1} parent=51 // pred_fallthru
          _
      $region52: #{tpu_custom_call.1} parent=5 // pred_fallthru
        _
    $region6: #{tpu_custom_call.1} parent=1 // loop_footer
      %s20 = sadd.s32 1, %s16
    $region7: #{tpu_custom_call.1} parent=1 // loop_footer_branch
      %15 = sbr.rel target = $region3
    $region8: #{tpu_custom_call.1} parent=1 // loop_exit
      _
    %766 = vsyncpa [#allocation3], 1
    %s767 = scalar_lea.sflag [#allocation3], 1
    %768 = vsyncpa %s767, 1
    %769 = vsyncpa [#allocation6], 1
    %770 = vsyncpa [#allocation4], 1
    %s771 = scalar_lea.sflag [#allocation4], 1
    %772 = vsyncpa %s771, 1

</llo_original>
